<compile_context>
chip_gen: v7x
topology: tpu7x:2x2x1
jax: 0.10.0
libtpu: 0.0.40
codegen_flags: <defaults>
</compile_context>

<pallas_src>
import math

import jax
import jax.numpy as jnp
from jax import lax
from jax.experimental import pallas as pl
from jax.experimental.pallas import tpu as pltpu


def _stats_kernel(pat_ref, w_ref, stat_ref):
    # Conv2d(3->64, k3, p1) + bias as one MXU matmul over im2col patches (bias folded
    # into the weights via the constant-1 patch column), then ReLU. bf16 in, f32 acc.
    y = jnp.maximum(
        jnp.dot(pat_ref[...], w_ref[...], preferred_element_type=jnp.float32), 0.0)
    # Per-tile partial one-pass BN stats: per-channel sum and sum of squares.
    stat_ref[...] = jnp.concatenate(
        [jnp.sum(y, axis=0, keepdims=True),
         jnp.sum(y * y, axis=0, keepdims=True)], axis=0)


def _apply_kernel(pat_ref, w_ref, ss_ref, out_ref):
    # Recompute the tiny conv matmul (cheaper than round-tripping activations via HBM).
    y = jnp.maximum(
        jnp.dot(pat_ref[...], w_ref[...], preferred_element_type=jnp.float32), 0.0)
    yn = y * ss_ref[0:1, :] + ss_ref[1:2, :]        # BN folded to scale/shift (f32)
    # MaxPool2d(2): tile rows are ordered (hp, wp, pair, wo), so the four members of
    # each 2x2 window sit at the same offset inside 4 contiguous row blocks.
    q = yn.shape[0] // 4
    m01 = jnp.maximum(yn[0 * q:1 * q], yn[1 * q:2 * q])
    m23 = jnp.maximum(yn[2 * q:3 * q], yn[3 * q:4 * q])
    out_ref[...] = jnp.maximum(m01, m23).astype(out_ref.dtype)


def encoder_forward(x_nchw, w, b, gamma, beta, eps=1e-5):
    """x_nchw: (N, Cin, H, W); w: (KH, KW, Cin, Cout) HWIO; returns (N, Cout, H/2, W/2)."""
    N, Cin, H, W = x_nchw.shape
    KH, KW, _, Cout = w.shape
    assert H % 2 == 0 and W % 2 == 0
    Ho, Wo = H // 2, W // 2
    K = KH * KW * Cin                              # 27 conv taps
    K1 = K + 1                                     # +1 constant column for the bias
    Kp = ((K1 + 31) // 32) * 32                    # 32: keep contraction narrow (do NOT widen)
    Cp = ((Cout + 127) // 128) * 128               # 128: lane-dense channels

    # ---- glue (plain JAX): NCHW -> NHWC, cast to bf16 EARLY, zero-pad, im2col ----
    x = jnp.transpose(x_nchw, (0, 2, 3, 1)).astype(jnp.bfloat16)
    xp = jnp.pad(x, ((0, 0), (1, 1), (1, 1), (0, 0)))
    cols = [xp[:, dy:dy + H, dx:dx + W, :] for dy in range(KH) for dx in range(KW)]
    cols.append(jnp.ones((N, H, W, 1), jnp.bfloat16))          # bias tap
    pat = jnp.concatenate(cols, axis=-1)                       # (N, H, W, K1) bf16

    # ---- row tiling: TM = 2*W*ppt rows/tile, targeting ~2048 rows per grid step ----
    pairs = N * H // 2                              # one "pair" = 2 input rows = 1 pooled row band
    step = 16 // math.gcd(W, 16)                    # keeps TM a multiple of 32
    ppt = min(max(1, 2048 // (2 * W)), pairs)
    ppt = max(step, (ppt // step) * step)
    pairs_pad = ((pairs + ppt - 1) // ppt) * ppt    # non-divisor tail -> zero-padded pairs
    T = pairs_pad // ppt
    TM = 2 * W * ppt
    Q = TM // 4                                     # pooled rows per tile (= ppt * Wo)

    # Reorder rows to (tile, hp, wp, pair, wo): each 2x2 pool window becomes the same
    # offset inside 4 contiguous row blocks of a tile -> no strided ops in-kernel.
    pat = pat.reshape(pairs, 2, Wo, 2, K1)
    pat = jnp.pad(pat, ((0, pairs_pad - pairs), (0, 0), (0, 0), (0, 0), (0, Kp - K1)))
    pat = pat.reshape(T, ppt, 2, Wo, 2, Kp).transpose(0, 2, 4, 1, 3, 5).reshape(T * TM, Kp)

    # Weights with the conv bias folded into the extra (constant-1) contraction row.
    w2d = (jnp.zeros((Kp, Cp), jnp.float32)
           .at[:K, :Cout].set(w.reshape(K, Cout))
           .at[K, :Cout].set(b)).astype(jnp.bfloat16)

    cparams = pltpu.CompilerParams(dimension_semantics=("parallel",),
                                   vmem_limit_bytes=32 * 1024 * 1024)

    # ---- pass 1: per-tile partial BN stats (parallel grid -> shards across TCs) ----
    stats = pl.pallas_call(
        _stats_kernel,
        out_shape=jax.ShapeDtypeStruct((T, 2, Cp), jnp.float32),
        grid=(T,),
        in_specs=[pl.BlockSpec((TM, Kp), lambda t: (t, 0)),
                  pl.BlockSpec((Kp, Cp), lambda t: (0, 0))],
        out_specs=pl.BlockSpec((None, 2, Cp), lambda t: (t, 0, 0)),
        compiler_params=cparams,
    )(pat, w2d)

    # ---- fold batch stats + gamma/beta into a single (2, Cp) scale/shift (tiny XLA) ----
    # TODO(synk): for very large N*H*W the one-pass E[x^2]-E[x]^2 in f32 can cancel;
    # switch to mean-shifted per-tile accumulation if that regime matters.
    tot = jnp.sum(stats, axis=0)                                 # (2, Cp)
    count = jnp.float32(N * H * W)
    mean = tot[0] / count
    var = jnp.maximum(tot[1] / count - mean * mean, 0.0)         # biased var (training-mode BN)
    # NOTE: gamma/beta must stay ZERO-padded so padded lanes get scale = shift = 0.
    gp = jnp.zeros((Cp,), jnp.float32).at[:Cout].set(gamma)
    bp = jnp.zeros((Cp,), jnp.float32).at[:Cout].set(beta)
    scale = gp * lax.rsqrt(var + eps)
    shift = bp - mean * scale
    ss = jnp.stack([scale, shift], axis=0)                       # (2, Cp) f32

    # ---- pass 2: conv (recomputed) + ReLU + BN + MaxPool2d(2); bf16 lane-dense out ----
    out2d = pl.pallas_call(
        _apply_kernel,
        out_shape=jax.ShapeDtypeStruct((T * Q, Cp), jnp.bfloat16),
        grid=(T,),
        in_specs=[pl.BlockSpec((TM, Kp), lambda t: (t, 0)),
                  pl.BlockSpec((Kp, Cp), lambda t: (0, 0)),
                  pl.BlockSpec((2, Cp), lambda t: (0, 0))],
        out_specs=pl.BlockSpec((Q, Cp), lambda t: (t, 0)),
        compiler_params=cparams,
    )(pat, w2d, ss)

    # (rows, 128) bf16 slab -> NCHW f32, dropping padded rows and channels.
    out = out2d[:N * Ho * Wo, :Cout].astype(jnp.float32)
    return out.reshape(N, Ho, Wo, Cout).transpose(0, 3, 1, 2)


def reference(x_nchw, w, b, gamma, beta, eps=1e-5):
    """Pure-JAX f32 reference matching the PyTorch forward (training-mode BN)."""
    x = jnp.transpose(x_nchw, (0, 2, 3, 1)).astype(jnp.float32)
    y = lax.conv_general_dilated(x, w, (1, 1), 'SAME',
                                 dimension_numbers=('NHWC', 'HWIO', 'NHWC'),
                                 precision=lax.Precision.HIGHEST)
    y = jnp.maximum(y + b, 0.0)
    mean = jnp.mean(y, axis=(0, 1, 2), keepdims=True)
    var = jnp.mean((y - mean) ** 2, axis=(0, 1, 2), keepdims=True)
    y = (y - mean) * lax.rsqrt(var + eps) * gamma + beta
    y = lax.reduce_window(y, -jnp.inf, lax.max, (1, 2, 2, 1), (1, 2, 2, 1), 'VALID')
    return jnp.transpose(y, (0, 3, 1, 2))


if __name__ == "__main__":
    key = jax.random.PRNGKey(0)
    k1, k2, k3, k4, k5 = jax.random.split(key, 5)

    N, Cin, H, W = 2, 3, 16, 16
    Cout, KH, KW = 64, 3, 3

    # Deterministic synthetic parameters (shapes from Encoder.__init__).
    x = jax.random.normal(k1, (N, Cin, H, W), jnp.float32)
    w = 0.1 * jax.random.normal(k2, (KH, KW, Cin, Cout), jnp.float32)   # conv1.weight (HWIO)
    b = 0.1 * jax.random.normal(k3, (Cout,), jnp.float32)               # conv1.bias
    gamma = 1.0 + 0.1 * jax.random.normal(k4, (Cout,), jnp.float32)     # bn1.weight
    beta = 0.1 * jax.random.normal(k5, (Cout,), jnp.float32)            # bn1.bias

    out = jax.block_until_ready(encoder_forward(x, w, b, gamma, beta))
    ref = reference(x, w, b, gamma, beta)

    assert out.shape == (N, Cout, H // 2, W // 2), out.shape
    # Tolerance reflects bf16 conv inputs (f32 acc) amplified by BN's ~3x inverse-std
    # plus the bf16 output store; the reference stays full f32.
    assert bool(jnp.allclose(out, ref, atol=3e-2, rtol=2e-2)), \
        float(jnp.max(jnp.abs(out - ref)))
    print("KERNEL_OK")
</pallas_src>

<mosaic_0001>
module attributes {stable_mosaic.version = 11 : i64} {
  func.func @_stats_kernel(%arg0: i32, %arg1: memref<512x32xbf16, #tpu.memory_space<vmem>>, %arg2: memref<32x128xbf16, #tpu.memory_space<vmem>>, %arg3: memref<1x2x128xf32, #tpu.memory_space<vmem>>) attributes {dimension_semantics = [#tpu.dimension_semantics<parallel>], iteration_bounds = array<i64: 1>, scalar_prefetch = 0 : i64, scratch_operands = 0 : i64, tpu.core_type = #tpu.core_type<tc>, window_params = [{transform_indices = @transform_0, window_bounds = array<i64: 512, 32>}, {pipeline_mode = #tpu.pipeline_mode<synchronous>, transform_indices = @transform_1, window_bounds = array<i64: 32, 128>}, {transform_indices = @transform_2, window_bounds = array<i64: 1, 2, 128>}]} {
    %c0 = arith.constant 0 : index
    %c0_0 = arith.constant 0 : index
    %0 = vector.load %arg1[%c0, %c0_0] : memref<512x32xbf16, #tpu.memory_space<vmem>>, vector<512x32xbf16>
    %c0_1 = arith.constant 0 : index
    %c0_2 = arith.constant 0 : index
    %1 = vector.load %arg2[%c0_1, %c0_2] : memref<32x128xbf16, #tpu.memory_space<vmem>>, vector<32x128xbf16>
    %cst = arith.constant dense<0.000000e+00> : vector<512x128xf32>
    %2 = tpu.matmul %0, %1, %cst {dimension_numbers = #tpu.dot_dimension_numbers<[1], [0], [0], [1], [0, 0, 1, 1], [], []>} : vector<512x32xbf16>, vector<32x128xbf16>, vector<512x128xf32> -> vector<512x128xf32>
    %cst_3 = arith.constant 0.000000e+00 : f32
    %3 = vector.broadcast %cst_3 : f32 to vector<512x128xf32>
    %4 = arith.maximumf %2, %3 : vector<512x128xf32>
    %cst_4 = arith.constant dense<0.000000e+00> : vector<128xf32>
    %5 = vector.multi_reduction <add>, %4, %cst_4 [0] : vector<512x128xf32> to vector<128xf32>
    %6 = vector.shape_cast %5 : vector<128xf32> to vector<1x128xf32>
    %7 = arith.mulf %4, %4 : vector<512x128xf32>
    %cst_5 = arith.constant dense<0.000000e+00> : vector<128xf32>
    %8 = vector.multi_reduction <add>, %7, %cst_5 [0] : vector<512x128xf32> to vector<128xf32>
    %9 = vector.shape_cast %8 : vector<128xf32> to vector<1x128xf32>
    %10 = tpu.concatenate %6, %9 in 0 : vector<1x128xf32>, vector<1x128xf32> -> vector<2x128xf32>
    %c0_6 = arith.constant 0 : index
    %c0_7 = arith.constant 0 : index
    %c0_8 = arith.constant 0 : index
    %11 = vector.load %arg3[%c0_6, %c0_7, %c0_8] : memref<1x2x128xf32, #tpu.memory_space<vmem>>, vector<1x2x128xf32>
    %12 = vector.shape_cast %11 : vector<1x2x128xf32> to vector<2x128xf32>
    %13 = vector.shape_cast %10 : vector<2x128xf32> to vector<1x2x128xf32>
    tpu.vector_store %arg3[%c0_6, %c0_7, %c0_8], %13 {strides = array<i32>} : memref<1x2x128xf32, #tpu.memory_space<vmem>>, vector<1x2x128xf32>,
    return
  }
  func.func @transform_0(%arg0: i32) -> (i32, i32) {
    %c0_i32 = arith.constant 0 : i32
    %c0_i32_0 = arith.constant 0 : i32
    return %arg0, %c0_i32 : i32, i32
  }
  func.func @transform_1(%arg0: i32) -> (i32, i32) {
    %c0_i32 = arith.constant 0 : i32
    %c0_i32_0 = arith.constant 0 : i32
    %c0_i32_1 = arith.constant 0 : i32
    return %c0_i32, %c0_i32_0 : i32, i32
  }
  func.func @transform_2(%arg0: i32) -> (i32, i32, i32) {
    %c0_i32 = arith.constant 0 : i32
    %c0_i32_0 = arith.constant 0 : i32
    %c0_i32_1 = arith.constant 0 : i32
    return %arg0, %c0_i32, %c0_i32_0 : i32, i32, i32
  }
}

</mosaic_0001>

<llo_original>
// kernel: tpu_custom_call.1
$region0: #{tpu_custom_call.1}
  #allocation0 [shape = 'u32[]', space=smem, size = 0x4, offset = 0x4, fixed_abs, tag = 'smem constant byte address 0x4 - core index']
  #allocation1 [shape = 'u32[144,128]{1,0:T(1,128)}', space=vmem, size = 0x12000, scoped, tag = 'internal scratch']
  %s0 = inlined_call_operand.vmem [shape: bf16[512,32], index: 0, kind: input, shape index: {}]
  %s1 = inlined_call_operand.vmem [shape: bf16[32,128], index: 1, kind: input, shape index: {}]
  %s2 = inlined_call_operand.hbm [shape: f32[1,2,128], index: 2, kind: output, shape index: {}]
  %s3 = sld [smem:[#allocation0]]
  $region18: #{tpu_custom_call.1} parent=0
    _
  %s5 = ssub.s32 1, %s3
  %s6 = scalar_select 0, %s5, %s3
  $region1: #{tpu_custom_call.1} parent=0
    #allocation2 [shape = 'u8[1024]{0}', space=vmem, size = 0x400, scoped, tag = 'output window, operand 0, single buffered']
    #allocation3 [shape = 's32[1]{0}', space=sflag, size = 0x4, scoped, tag = 'scoped memory for tpu_custom_call.1']
    %7 = vsyncpa [#allocation3], 0
    // Predicated region
    $region2: #{tpu_custom_call.1} parent=1 // pred_check
      _
    $region3: #{tpu_custom_call.1} parent=1 // pred_check_branch
      %9 = sbr.rel (0) target = $region5
    $region4: #{tpu_custom_call.1} parent=1 // pred_region
      _
    $region5: #{tpu_custom_call.1} parent=1 // pred_fallthru
      _
    // Predicated region
    $region6: #{tpu_custom_call.1} parent=1 // pred_check
      _
    $region7: #{tpu_custom_call.1} parent=1 // pred_check_branch
      %11 = sbr.rel (0) target = $region9
    $region8: #{tpu_custom_call.1} parent=1 // pred_region
      _
    $region9: #{tpu_custom_call.1} parent=1 // pred_fallthru
      _
    %v13 = vld [vmem:[%s0] sm:$0xf]
    %v14 = vld [vmem:[%s0 + $0x4] sm:$0xf]
    %v15 = vld [vmem:[%s0 + $0x8] sm:$0xf]
    %v16 = vld [vmem:[%s0 + $0xc] sm:$0xf]
    %v17 = vld [vmem:[%s0 + $0x10] sm:$0xf]
    %v18 = vld [vmem:[%s0 + $0x14] sm:$0xf]
    %v19 = vld [vmem:[%s0 + $0x18] sm:$0xf]
    %v20 = vld [vmem:[%s0 + $0x1c] sm:$0xf]
    %v21 = vld [vmem:[%s0 + $0x20] sm:$0xf]
    %v22 = vld [vmem:[%s0 + $0x24] sm:$0xf]
    %v23 = vld [vmem:[%s0 + $0x28] sm:$0xf]
    %v24 = vld [vmem:[%s0 + $0x2c] sm:$0xf]
    %v25 = vld [vmem:[%s0 + $0x30] sm:$0xf]
    %v26 = vld [vmem:[%s0 + $0x34] sm:$0xf]
    %v27 = vld [vmem:[%s0 + $0x38] sm:$0xf]
    %v28 = vld [vmem:[%s0 + $0x3c] sm:$0xf]
    %v29 = vld [vmem:[%s0 + $0x40] sm:$0xf]
    %v30 = vld [vmem:[%s0 + $0x44] sm:$0xf]
    %v31 = vld [vmem:[%s0 + $0x48] sm:$0xf]
    %v32 = vld [vmem:[%s0 + $0x4c] sm:$0xf]
    %v33 = vld [vmem:[%s0 + $0x50] sm:$0xf]
    %v34 = vld [vmem:[%s0 + $0x54] sm:$0xf]
    %v35 = vld [vmem:[%s0 + $0x58] sm:$0xf]
    %v36 = vld [vmem:[%s0 + $0x5c] sm:$0xf]
    %v37 = vld [vmem:[%s0 + $0x60] sm:$0xf]
    %v38 = vld [vmem:[%s0 + $0x64] sm:$0xf]
    %v39 = vld [vmem:[%s0 + $0x68] sm:$0xf]
    %v40 = vld [vmem:[%s0 + $0x6c] sm:$0xf]
    %v41 = vld [vmem:[%s0 + $0x70] sm:$0xf]
    %v42 = vld [vmem:[%s0 + $0x74] sm:$0xf]
    %v43 = vld [vmem:[%s0 + $0x78] sm:$0xf]
    %v44 = vld [vmem:[%s0 + $0x7c] sm:$0xf]
    %v45 = vld [vmem:[%s0 + $0x80] sm:$0xf]
    %v46 = vld [vmem:[%s0 + $0x84] sm:$0xf]
    %v47 = vld [vmem:[%s0 + $0x88] sm:$0xf]
    %v48 = vld [vmem:[%s0 + $0x8c] sm:$0xf]
    %v49 = vld [vmem:[%s0 + $0x90] sm:$0xf]
    %v50 = vld [vmem:[%s0 + $0x94] sm:$0xf]
    %v51 = vld [vmem:[%s0 + $0x98] sm:$0xf]
    %v52 = vld [vmem:[%s0 + $0x9c] sm:$0xf]
    %v53 = vld [vmem:[%s0 + $0xa0] sm:$0xf]
    %v54 = vld [vmem:[%s0 + $0xa4] sm:$0xf]
    %v55 = vld [vmem:[%s0 + $0xa8] sm:$0xf]
    %v56 = vld [vmem:[%s0 + $0xac] sm:$0xf]
    %v57 = vld [vmem:[%s0 + $0xb0] sm:$0xf]
    %v58 = vld [vmem:[%s0 + $0xb4] sm:$0xf]
    %v59 = vld [vmem:[%s0 + $0xb8] sm:$0xf]
    %v60 = vld [vmem:[%s0 + $0xbc] sm:$0xf]
    %v61 = vld [vmem:[%s0 + $0xc0] sm:$0xf]
    %v62 = vld [vmem:[%s0 + $0xc4] sm:$0xf]
    %v63 = vld [vmem:[%s0 + $0xc8] sm:$0xf]
    %v64 = vld [vmem:[%s0 + $0xcc] sm:$0xf]
    %v65 = vld [vmem:[%s0 + $0xd0] sm:$0xf]
    %v66 = vld [vmem:[%s0 + $0xd4] sm:$0xf]
    %v67 = vld [vmem:[%s0 + $0xd8] sm:$0xf]
    %v68 = vld [vmem:[%s0 + $0xdc] sm:$0xf]
    %v69 = vld [vmem:[%s0 + $0xe0] sm:$0xf]
    %v70 = vld [vmem:[%s0 + $0xe4] sm:$0xf]
    %v71 = vld [vmem:[%s0 + $0xe8] sm:$0xf]
    %v72 = vld [vmem:[%s0 + $0xec] sm:$0xf]
    %v73 = vld [vmem:[%s0 + $0xf0] sm:$0xf]
    %v74 = vld [vmem:[%s0 + $0xf4] sm:$0xf]
    %v75 = vld [vmem:[%s0 + $0xf8] sm:$0xf]
    %v76 = vld [vmem:[%s0 + $0xfc] sm:$0xf]
    %v77 = vld [vmem:[%s1] sm:$0xf]
    %v78 = vld [vmem:[%s1 + $0x4] sm:$0xf]
    %v79 = vld [vmem:[%s1 + $0x8] sm:$0xf]
    %v80 = vld [vmem:[%s1 + $0xc] sm:$0xf]
    %v145 = vunpack.c.l.b16 %v13
    %v146 = vunpack.c.l.b16 %v14
    %v147 = vunpack.c.l.b16 %v15
    %v148 = vunpack.c.l.b16 %v16
    %v149 = vunpack.c.l.b16 %v17
    %v150 = vunpack.c.l.b16 %v18
    %v151 = vunpack.c.l.b16 %v19
    %v152 = vunpack.c.l.b16 %v20
    %v153 = vunpack.c.l.b16 %v21
    %v154 = vunpack.c.l.b16 %v22
    %v155 = vunpack.c.l.b16 %v23
    %v156 = vunpack.c.l.b16 %v24
    %v157 = vunpack.c.l.b16 %v25
    %v158 = vunpack.c.l.b16 %v26
    %v159 = vunpack.c.l.b16 %v27
    %v160 = vunpack.c.l.b16 %v28
    %v161 = vunpack.c.l.b16 %v29
    %v162 = vunpack.c.l.b16 %v30
    %v163 = vunpack.c.l.b16 %v31
    %v164 = vunpack.c.l.b16 %v32
    %v165 = vunpack.c.l.b16 %v33
    %v166 = vunpack.c.l.b16 %v34
    %v167 = vunpack.c.l.b16 %v35
    %v168 = vunpack.c.l.b16 %v36
    %v169 = vunpack.c.l.b16 %v37
    %v170 = vunpack.c.l.b16 %v38
    %v171 = vunpack.c.l.b16 %v39
    %v172 = vunpack.c.l.b16 %v40
    %v173 = vunpack.c.l.b16 %v41
    %v174 = vunpack.c.l.b16 %v42
    %v175 = vunpack.c.l.b16 %v43
    %v176 = vunpack.c.l.b16 %v44
    %v177 = vunpack.c.l.b16 %v45
    %v178 = vunpack.c.l.b16 %v46
    %v179 = vunpack.c.l.b16 %v47
    %v180 = vunpack.c.l.b16 %v48
    %v181 = vunpack.c.l.b16 %v49
    %v182 = vunpack.c.l.b16 %v50
    %v183 = vunpack.c.l.b16 %v51
    %v184 = vunpack.c.l.b16 %v52
    %v185 = vunpack.c.l.b16 %v53
    %v186 = vunpack.c.l.b16 %v54
    %v187 = vunpack.c.l.b16 %v55
    %v188 = vunpack.c.l.b16 %v56
    %v189 = vunpack.c.l.b16 %v57
    %v190 = vunpack.c.l.b16 %v58
    %v191 = vunpack.c.l.b16 %v59
    %v192 = vunpack.c.l.b16 %v60
    %v193 = vunpack.c.l.b16 %v61
    %v194 = vunpack.c.l.b16 %v62
    %v195 = vunpack.c.l.b16 %v63
    %v196 = vunpack.c.l.b16 %v64
    %v197 = vunpack.c.l.b16 %v65
    %v198 = vunpack.c.l.b16 %v66
    %v199 = vunpack.c.l.b16 %v67
    %v200 = vunpack.c.l.b16 %v68
    %v201 = vunpack.c.l.b16 %v69
    %v202 = vunpack.c.l.b16 %v70
    %v203 = vunpack.c.l.b16 %v71
    %v204 = vunpack.c.l.b16 %v72
    %v205 = vunpack.c.l.b16 %v73
    %v206 = vunpack.c.l.b16 %v74
    %v207 = vunpack.c.l.b16 %v75
    %v208 = vunpack.c.l.b16 %v76
    %v209 = vpack.c.b16 %v146, %v145
    %v210 = vpack.c.b16 %v148, %v147
    %v211 = vpack.c.b16 %v150, %v149
    %v212 = vpack.c.b16 %v152, %v151
    %v213 = vpack.c.b16 %v154, %v153
    %v214 = vpack.c.b16 %v156, %v155
    %v215 = vpack.c.b16 %v158, %v157
    %v216 = vpack.c.b16 %v160, %v159
    %v217 = vpack.c.b16 %v162, %v161
    %v218 = vpack.c.b16 %v164, %v163
    %v219 = vpack.c.b16 %v166, %v165
    %v220 = vpack.c.b16 %v168, %v167
    %v221 = vpack.c.b16 %v170, %v169
    %v222 = vpack.c.b16 %v172, %v171
    %v223 = vpack.c.b16 %v174, %v173
    %v224 = vpack.c.b16 %v176, %v175
    %v225 = vpack.c.b16 %v178, %v177
    %v226 = vpack.c.b16 %v180, %v179
    %v227 = vpack.c.b16 %v182, %v181
    %v228 = vpack.c.b16 %v184, %v183
    %v229 = vpack.c.b16 %v186, %v185
    %v230 = vpack.c.b16 %v188, %v187
    %v231 = vpack.c.b16 %v190, %v189
    %v232 = vpack.c.b16 %v192, %v191
    %v233 = vpack.c.b16 %v194, %v193
    %v234 = vpack.c.b16 %v196, %v195
    %v235 = vpack.c.b16 %v198, %v197
    %v236 = vpack.c.b16 %v200, %v199
    %v237 = vpack.c.b16 %v202, %v201
    %v238 = vpack.c.b16 %v204, %v203
    %v239 = vpack.c.b16 %v206, %v205
    %v240 = vpack.c.b16 %v208, %v207
    %v245 = vunpack.c.l.b16 %v77
    %v246 = vunpack.c.l.b16 %v78
    %v247 = vunpack.c.l.b16 %v79
    %v248 = vunpack.c.l.b16 %v80
    %v249 = vpack.c.b16 %v246, %v245
    %v250 = vpack.c.b16 %v248, %v247
    %vm253 = vcmask 261120
    %v255 = vsel %vm253, %v209, 0
    %v258 = vsel %vm253, %v210, 0
    %v261 = vsel %vm253, %v211, 0
    %v264 = vsel %vm253, %v212, 0
    %v267 = vsel %vm253, %v213, 0
    %v270 = vsel %vm253, %v214, 0
    %v273 = vsel %vm253, %v215, 0
    %v276 = vsel %vm253, %v216, 0
    %v279 = vsel %vm253, %v217, 0
    %v282 = vsel %vm253, %v218, 0
    %v285 = vsel %vm253, %v219, 0
    %v288 = vsel %vm253, %v220, 0
    %v291 = vsel %vm253, %v221, 0
    %v294 = vsel %vm253, %v222, 0
    %v297 = vsel %vm253, %v223, 0
    %v300 = vsel %vm253, %v224, 0
    %v303 = vsel %vm253, %v225, 0
    %v306 = vsel %vm253, %v226, 0
    %v309 = vsel %vm253, %v227, 0
    %v312 = vsel %vm253, %v228, 0
    %v315 = vsel %vm253, %v229, 0
    %v318 = vsel %vm253, %v230, 0
    %v321 = vsel %vm253, %v231, 0
    %v324 = vsel %vm253, %v232, 0
    %v327 = vsel %vm253, %v233, 0
    %v330 = vsel %vm253, %v234, 0
    %v333 = vsel %vm253, %v235, 0
    %v336 = vsel %vm253, %v236, 0
    %v339 = vsel %vm253, %v237, 0
    %v342 = vsel %vm253, %v238, 0
    %v345 = vsel %vm253, %v239, 0
    %v348 = vsel %vm253, %v240, 0
    %350 = vmatprep.subr.bf16.mxu0 0
    %351 = vmatpush1.bf16.msra.mxu0 %v249
    %352 = vmatprep.subr.bf16.mxu0 0
    %353 = vmatpush1.bf16.msra.mxu0 %v250
    %354 = vmatprep.subr.bf16.mxu0 0
    %355 = vmatpush1.bf16.msra.mxu0 0
    %356 = vmatprep.subr.bf16.mxu0 0
    %357 = vmatpush1.bf16.msra.mxu0 0
    %358 = vmatprep.subr.bf16.mxu0 0
    %359 = vmatpush1.bf16.msra.mxu0 0
    %360 = vmatprep.subr.bf16.mxu0 0
    %361 = vmatpush1.bf16.msra.mxu0 0
    %362 = vmatprep.subr.bf16.mxu0 0
    %363 = vmatpush1.bf16.msra.mxu0 0
    %364 = vmatprep.subr.bf16.mxu0 0
    %365 = vmatpush1.bf16.msra.mxu0 0
    %366 = vmatprep.subr.bf16.mxu0 0
    %367 = vmatpush1.bf16.msra.mxu0 0
    %368 = vmatprep.subr.bf16.mxu0 0
    %369 = vmatpush1.bf16.msra.mxu0 0
    %370 = vmatprep.subr.bf16.mxu0 0
    %371 = vmatpush1.bf16.msra.mxu0 0
    %372 = vmatprep.subr.bf16.mxu0 0
    %373 = vmatpush1.bf16.msra.mxu0 0
    %374 = vmatprep.subr.bf16.mxu0 0
    %375 = vmatpush1.bf16.msra.mxu0 0
    %376 = vmatprep.subr.bf16.mxu0 0
    %377 = vmatpush1.bf16.msra.mxu0 0
    %378 = vmatprep.subr.bf16.mxu0 0
    %379 = vmatpush1.bf16.msra.mxu0 0
    %380 = vmatprep.subr.bf16.mxu0 0
    %381 = vmatpush1.bf16.msra.mxu0 0
    %382 = vmatprep.mubr.bf16.mxu0 0
    %383 = vmatmul.mubr.bf16.gmra.mrb[0].mxu0 %v255
    %v384 = vpop.f32.mrb[0].mxu0
    %v385 = vadd.f32 0.0, %v384
    %v386 = vpop.f32.mrb[0].mxu0
    %v387 = vpop.f32.mrb[0].mxu0
    %v388 = vadd.f32 0.0, %v387
    %v389 = vpop.f32.mrb[0].mxu0
    %390 = vmatprep.mubr.bf16.mxu0 0
    %391 = vmatmul.mubr.bf16.gmra.mrb[0].mxu0 %v258
    %v392 = vpop.f32.mrb[0].mxu0
    %v393 = vadd.f32 0.0, %v392
    %v394 = vpop.f32.mrb[0].mxu0
    %v395 = vpop.f32.mrb[0].mxu0
    %v396 = vadd.f32 0.0, %v395
    %v397 = vpop.f32.mrb[0].mxu0
    %398 = vmatprep.mubr.bf16.mxu0 0
    %399 = vmatmul.mubr.bf16.gmra.mrb[0].mxu0 %v261
    %v400 = vpop.f32.mrb[0].mxu0
    %v401 = vadd.f32 0.0, %v400
    %v402 = vpop.f32.mrb[0].mxu0
    %v403 = vpop.f32.mrb[0].mxu0
    %v404 = vadd.f32 0.0, %v403
    %v405 = vpop.f32.mrb[0].mxu0
    %406 = vmatprep.mubr.bf16.mxu0 0
    %407 = vmatmul.mubr.bf16.gmra.mrb[0].mxu0 %v264
    %v408 = vpop.f32.mrb[0].mxu0
    %v409 = vadd.f32 0.0, %v408
    %v410 = vpop.f32.mrb[0].mxu0
    %v411 = vpop.f32.mrb[0].mxu0
    %v412 = vadd.f32 0.0, %v411
    %v413 = vpop.f32.mrb[0].mxu0
    %414 = vmatprep.mubr.bf16.mxu0 0
    %415 = vmatmul.mubr.bf16.gmra.mrb[0].mxu0 %v267
    %v416 = vpop.f32.mrb[0].mxu0
    %v417 = vadd.f32 0.0, %v416
    %v418 = vpop.f32.mrb[0].mxu0
    %v419 = vpop.f32.mrb[0].mxu0
    %v420 = vadd.f32 0.0, %v419
    %v421 = vpop.f32.mrb[0].mxu0
    %422 = vmatprep.mubr.bf16.mxu0 0
    %423 = vmatmul.mubr.bf16.gmra.mrb[0].mxu0 %v270
    %v424 = vpop.f32.mrb[0].mxu0
    %v425 = vadd.f32 0.0, %v424
    %v426 = vpop.f32.mrb[0].mxu0
    %v427 = vpop.f32.mrb[0].mxu0
    %v428 = vadd.f32 0.0, %v427
    %v429 = vpop.f32.mrb[0].mxu0
    %430 = vmatprep.mubr.bf16.mxu0 0
    %431 = vmatmul.mubr.bf16.gmra.mrb[0].mxu0 %v273
    %v432 = vpop.f32.mrb[0].mxu0
    %v433 = vadd.f32 0.0, %v432
    %v434 = vpop.f32.mrb[0].mxu0
    %v435 = vpop.f32.mrb[0].mxu0
    %v436 = vadd.f32 0.0, %v435
    %v437 = vpop.f32.mrb[0].mxu0
    %438 = vmatprep.mubr.bf16.mxu0 0
    %439 = vmatmul.mubr.bf16.gmra.mrb[0].mxu0 %v276
    %v440 = vpop.f32.mrb[0].mxu0
    %v441 = vadd.f32 0.0, %v440
    %v442 = vpop.f32.mrb[0].mxu0
    %v443 = vpop.f32.mrb[0].mxu0
    %v444 = vadd.f32 0.0, %v443
    %v445 = vpop.f32.mrb[0].mxu0
    %446 = vmatprep.mubr.bf16.mxu0 0
    %447 = vmatmul.mubr.bf16.gmra.mrb[0].mxu0 %v279
    %v448 = vpop.f32.mrb[0].mxu0
    %v449 = vadd.f32 0.0, %v448
    %v450 = vpop.f32.mrb[0].mxu0
    %v451 = vpop.f32.mrb[0].mxu0
    %v452 = vadd.f32 0.0, %v451
    %v453 = vpop.f32.mrb[0].mxu0
    %454 = vmatprep.mubr.bf16.mxu0 0
    %455 = vmatmul.mubr.bf16.gmra.mrb[0].mxu0 %v282
    %v456 = vpop.f32.mrb[0].mxu0
    %v457 = vadd.f32 0.0, %v456
    %v458 = vpop.f32.mrb[0].mxu0
    %v459 = vpop.f32.mrb[0].mxu0
    %v460 = vadd.f32 0.0, %v459
    %v461 = vpop.f32.mrb[0].mxu0
    %462 = vmatprep.mubr.bf16.mxu0 0
    %463 = vmatmul.mubr.bf16.gmra.mrb[0].mxu0 %v285
    %v464 = vpop.f32.mrb[0].mxu0
    %v465 = vadd.f32 0.0, %v464
    %v466 = vpop.f32.mrb[0].mxu0
    %v467 = vpop.f32.mrb[0].mxu0
    %v468 = vadd.f32 0.0, %v467
    %v469 = vpop.f32.mrb[0].mxu0
    %470 = vmatprep.mubr.bf16.mxu0 0
    %471 = vmatmul.mubr.bf16.gmra.mrb[0].mxu0 %v288
    %v472 = vpop.f32.mrb[0].mxu0
    %v473 = vadd.f32 0.0, %v472
    %v474 = vpop.f32.mrb[0].mxu0
    %v475 = vpop.f32.mrb[0].mxu0
    %v476 = vadd.f32 0.0, %v475
    %v477 = vpop.f32.mrb[0].mxu0
    %478 = vmatprep.mubr.bf16.mxu0 0
    %479 = vmatmul.mubr.bf16.gmra.mrb[0].mxu0 %v291
    %v480 = vpop.f32.mrb[0].mxu0
    %v481 = vadd.f32 0.0, %v480
    %v482 = vpop.f32.mrb[0].mxu0
    %v483 = vpop.f32.mrb[0].mxu0
    %v484 = vadd.f32 0.0, %v483
    %v485 = vpop.f32.mrb[0].mxu0
    %486 = vmatprep.mubr.bf16.mxu0 0
    %487 = vmatmul.mubr.bf16.gmra.mrb[0].mxu0 %v294
    %v488 = vpop.f32.mrb[0].mxu0
    %v489 = vadd.f32 0.0, %v488
    %v490 = vpop.f32.mrb[0].mxu0
    %v491 = vpop.f32.mrb[0].mxu0
    %v492 = vadd.f32 0.0, %v491
    %v493 = vpop.f32.mrb[0].mxu0
    %494 = vmatprep.mubr.bf16.mxu0 0
    %495 = vmatmul.mubr.bf16.gmra.mrb[0].mxu0 %v297
    %v496 = vpop.f32.mrb[0].mxu0
    %v497 = vadd.f32 0.0, %v496
    %v498 = vpop.f32.mrb[0].mxu0
    %v499 = vpop.f32.mrb[0].mxu0
    %v500 = vadd.f32 0.0, %v499
    %v501 = vpop.f32.mrb[0].mxu0
    %502 = vmatprep.mubr.bf16.mxu0 0
    %503 = vmatmul.mubr.bf16.gmra.mrb[0].mxu0 %v300
    %v504 = vpop.f32.mrb[0].mxu0
    %v505 = vadd.f32 0.0, %v504
    %v506 = vpop.f32.mrb[0].mxu0
    %v507 = vpop.f32.mrb[0].mxu0
    %v508 = vadd.f32 0.0, %v507
    %v509 = vpop.f32.mrb[0].mxu0
    %510 = vmatprep.mubr.bf16.mxu0 0
    %511 = vmatmul.mubr.bf16.gmra.mrb[0].mxu0 %v303
    %v512 = vpop.f32.mrb[0].mxu0
    %v513 = vadd.f32 0.0, %v512
    %v514 = vpop.f32.mrb[0].mxu0
    %v515 = vpop.f32.mrb[0].mxu0
    %v516 = vadd.f32 0.0, %v515
    %v517 = vpop.f32.mrb[0].mxu0
    %518 = vmatprep.mubr.bf16.mxu0 0
    %519 = vmatmul.mubr.bf16.gmra.mrb[0].mxu0 %v306
    %v520 = vpop.f32.mrb[0].mxu0
    %v521 = vadd.f32 0.0, %v520
    %v522 = vpop.f32.mrb[0].mxu0
    %v523 = vpop.f32.mrb[0].mxu0
    %v524 = vadd.f32 0.0, %v523
    %v525 = vpop.f32.mrb[0].mxu0
    %526 = vmatprep.mubr.bf16.mxu0 0
    %527 = vmatmul.mubr.bf16.gmra.mrb[0].mxu0 %v309
    %v528 = vpop.f32.mrb[0].mxu0
    %v529 = vadd.f32 0.0, %v528
    %v530 = vpop.f32.mrb[0].mxu0
    %v531 = vpop.f32.mrb[0].mxu0
    %v532 = vadd.f32 0.0, %v531
    %v533 = vpop.f32.mrb[0].mxu0
    %534 = vmatprep.mubr.bf16.mxu0 0
    %535 = vmatmul.mubr.bf16.gmra.mrb[0].mxu0 %v312
    %v536 = vpop.f32.mrb[0].mxu0
    %v537 = vadd.f32 0.0, %v536
    %v538 = vpop.f32.mrb[0].mxu0
    %v539 = vpop.f32.mrb[0].mxu0
    %v540 = vadd.f32 0.0, %v539
    %v541 = vpop.f32.mrb[0].mxu0
    %542 = vmatprep.mubr.bf16.mxu0 0
    %543 = vmatmul.mubr.bf16.gmra.mrb[0].mxu0 %v315
    %v544 = vpop.f32.mrb[0].mxu0
    %v545 = vadd.f32 0.0, %v544
    %v546 = vpop.f32.mrb[0].mxu0
    %v547 = vpop.f32.mrb[0].mxu0
    %v548 = vadd.f32 0.0, %v547
    %v549 = vpop.f32.mrb[0].mxu0
    %550 = vmatprep.mubr.bf16.mxu0 0
    %551 = vmatmul.mubr.bf16.gmra.mrb[0].mxu0 %v318
    %v552 = vpop.f32.mrb[0].mxu0
    %v553 = vadd.f32 0.0, %v552
    %v554 = vpop.f32.mrb[0].mxu0
    %v555 = vpop.f32.mrb[0].mxu0
    %v556 = vadd.f32 0.0, %v555
    %v557 = vpop.f32.mrb[0].mxu0
    %558 = vmatprep.mubr.bf16.mxu0 0
    %559 = vmatmul.mubr.bf16.gmra.mrb[0].mxu0 %v321
    %v560 = vpop.f32.mrb[0].mxu0
    %v561 = vadd.f32 0.0, %v560
    %v562 = vpop.f32.mrb[0].mxu0
    %v563 = vpop.f32.mrb[0].mxu0
    %v564 = vadd.f32 0.0, %v563
    %v565 = vpop.f32.mrb[0].mxu0
    %566 = vmatprep.mubr.bf16.mxu0 0
    %567 = vmatmul.mubr.bf16.gmra.mrb[0].mxu0 %v324
    %v568 = vpop.f32.mrb[0].mxu0
    %v569 = vadd.f32 0.0, %v568
    %v570 = vpop.f32.mrb[0].mxu0
    %v571 = vpop.f32.mrb[0].mxu0
    %v572 = vadd.f32 0.0, %v571
    %v573 = vpop.f32.mrb[0].mxu0
    %574 = vmatprep.mubr.bf16.mxu0 0
    %575 = vmatmul.mubr.bf16.gmra.mrb[0].mxu0 %v327
    %v576 = vpop.f32.mrb[0].mxu0
    %v577 = vadd.f32 0.0, %v576
    %v578 = vpop.f32.mrb[0].mxu0
    %v579 = vpop.f32.mrb[0].mxu0
    %v580 = vadd.f32 0.0, %v579
    %v581 = vpop.f32.mrb[0].mxu0
    %582 = vmatprep.mubr.bf16.mxu0 0
    %583 = vmatmul.mubr.bf16.gmra.mrb[0].mxu0 %v330
    %v584 = vpop.f32.mrb[0].mxu0
    %v585 = vadd.f32 0.0, %v584
    %v586 = vpop.f32.mrb[0].mxu0
    %v587 = vpop.f32.mrb[0].mxu0
    %v588 = vadd.f32 0.0, %v587
    %v589 = vpop.f32.mrb[0].mxu0
    %590 = vmatprep.mubr.bf16.mxu0 0
    %591 = vmatmul.mubr.bf16.gmra.mrb[0].mxu0 %v333
    %v592 = vpop.f32.mrb[0].mxu0
    %v593 = vadd.f32 0.0, %v592
    %v594 = vpop.f32.mrb[0].mxu0
    %v595 = vpop.f32.mrb[0].mxu0
    %v596 = vadd.f32 0.0, %v595
    %v597 = vpop.f32.mrb[0].mxu0
    %598 = vmatprep.mubr.bf16.mxu0 0
    %599 = vmatmul.mubr.bf16.gmra.mrb[0].mxu0 %v336
    %v600 = vpop.f32.mrb[0].mxu0
    %v601 = vadd.f32 0.0, %v600
    %v602 = vpop.f32.mrb[0].mxu0
    %v603 = vpop.f32.mrb[0].mxu0
    %v604 = vadd.f32 0.0, %v603
    %v605 = vpop.f32.mrb[0].mxu0
    %606 = vmatprep.mubr.bf16.mxu0 0
    %607 = vmatmul.mubr.bf16.gmra.mrb[0].mxu0 %v339
    %v608 = vpop.f32.mrb[0].mxu0
    %v609 = vadd.f32 0.0, %v608
    %v610 = vpop.f32.mrb[0].mxu0
    %v611 = vpop.f32.mrb[0].mxu0
    %v612 = vadd.f32 0.0, %v611
    %v613 = vpop.f32.mrb[0].mxu0
    %614 = vmatprep.mubr.bf16.mxu0 0
    %615 = vmatmul.mubr.bf16.gmra.mrb[0].mxu0 %v342
    %v616 = vpop.f32.mrb[0].mxu0
    %v617 = vadd.f32 0.0, %v616
    %v618 = vpop.f32.mrb[0].mxu0
    %v619 = vpop.f32.mrb[0].mxu0
    %v620 = vadd.f32 0.0, %v619
    %v621 = vpop.f32.mrb[0].mxu0
    %622 = vmatprep.mubr.bf16.mxu0 0
    %623 = vmatmul.mubr.bf16.gmra.mrb[0].mxu0 %v345
    %v624 = vpop.f32.mrb[0].mxu0
    %v625 = vadd.f32 0.0, %v624
    %v626 = vpop.f32.mrb[0].mxu0
    %v627 = vpop.f32.mrb[0].mxu0
    %v628 = vadd.f32 0.0, %v627
    %v629 = vpop.f32.mrb[0].mxu0
    %630 = vmatprep.mubr.bf16.mxu0 0
    %631 = vmatmul.mubr.bf16.gmra.mrb[0].mxu0 %v348
    %v632 = vpop.f32.mrb[0].mxu0
    %v633 = vadd.f32 0.0, %v632
    %v634 = vpop.f32.mrb[0].mxu0
    %v635 = vpop.f32.mrb[0].mxu0
    %v636 = vadd.f32 0.0, %v635
    %v637 = vpop.f32.mrb[0].mxu0
    %638 = vdwg.mxu0
    %v639 = vmax.f32 %v385, 0.0
    %v640 = vmax.f32 %v388, 0.0
    %v641 = vmax.f32 %v393, 0.0
    %v642 = vmax.f32 %v396, 0.0
    %v643 = vmax.f32 %v401, 0.0
    %v644 = vmax.f32 %v404, 0.0
    %v645 = vmax.f32 %v409, 0.0
    %v646 = vmax.f32 %v412, 0.0
    %v647 = vmax.f32 %v417, 0.0
    %v648 = vmax.f32 %v420, 0.0
    %v649 = vmax.f32 %v425, 0.0
    %v650 = vmax.f32 %v428, 0.0
    %v651 = vmax.f32 %v433, 0.0
    %v652 = vmax.f32 %v436, 0.0
    %v653 = vmax.f32 %v441, 0.0
    %v654 = vmax.f32 %v444, 0.0
    %v655 = vmax.f32 %v449, 0.0
    %v656 = vmax.f32 %v452, 0.0
    %v657 = vmax.f32 %v457, 0.0
    %v658 = vmax.f32 %v460, 0.0
    %v659 = vmax.f32 %v465, 0.0
    %v660 = vmax.f32 %v468, 0.0
    %v661 = vmax.f32 %v473, 0.0
    %v662 = vmax.f32 %v476, 0.0
    %v663 = vmax.f32 %v481, 0.0
    %v664 = vmax.f32 %v484, 0.0
    %v665 = vmax.f32 %v489, 0.0
    %v666 = vmax.f32 %v492, 0.0
    %v667 = vmax.f32 %v497, 0.0
    %v668 = vmax.f32 %v500, 0.0
    %v669 = vmax.f32 %v505, 0.0
    %v670 = vmax.f32 %v508, 0.0
    %v671 = vmax.f32 %v513, 0.0
    %v672 = vmax.f32 %v516, 0.0
    %v673 = vmax.f32 %v521, 0.0
    %v674 = vmax.f32 %v524, 0.0
    %v675 = vmax.f32 %v529, 0.0
    %v676 = vmax.f32 %v532, 0.0
    %v677 = vmax.f32 %v537, 0.0
    %v678 = vmax.f32 %v540, 0.0
    %v679 = vmax.f32 %v545, 0.0
    %v680 = vmax.f32 %v548, 0.0
    %v681 = vmax.f32 %v553, 0.0
    %v682 = vmax.f32 %v556, 0.0
    %v683 = vmax.f32 %v561, 0.0
    %v684 = vmax.f32 %v564, 0.0
    %v685 = vmax.f32 %v569, 0.0
    %v686 = vmax.f32 %v572, 0.0
    %v687 = vmax.f32 %v577, 0.0
    %v688 = vmax.f32 %v580, 0.0
    %v689 = vmax.f32 %v585, 0.0
    %v690 = vmax.f32 %v588, 0.0
    %v691 = vmax.f32 %v593, 0.0
    %v692 = vmax.f32 %v596, 0.0
    %v693 = vmax.f32 %v601, 0.0
    %v694 = vmax.f32 %v604, 0.0
    %v695 = vmax.f32 %v609, 0.0
    %v696 = vmax.f32 %v612, 0.0
    %v697 = vmax.f32 %v617, 0.0
    %v698 = vmax.f32 %v620, 0.0
    %v699 = vmax.f32 %v625, 0.0
    %v700 = vmax.f32 %v628, 0.0
    %v701 = vmax.f32 %v633, 0.0
    %v702 = vmax.f32 %v636, 0.0
    %v703 = vadd.f32 %v639, %v640
    %v704 = vadd.f32 %v703, %v641
    %v705 = vadd.f32 %v704, %v642
    %v706 = vadd.f32 %v705, %v643
    %v707 = vadd.f32 %v706, %v644
    %v708 = vadd.f32 %v707, %v645
    %v709 = vadd.f32 %v708, %v646
    %v710 = vadd.f32 %v709, %v647
    %v711 = vadd.f32 %v710, %v648
    %v712 = vadd.f32 %v711, %v649
    %v713 = vadd.f32 %v712, %v650
    %v714 = vadd.f32 %v713, %v651
    %v715 = vadd.f32 %v714, %v652
    %v716 = vadd.f32 %v715, %v653
    %v717 = vadd.f32 %v716, %v654
    %v718 = vadd.f32 %v717, %v655
    %v719 = vadd.f32 %v718, %v656
    %v720 = vadd.f32 %v719, %v657
    %v721 = vadd.f32 %v720, %v658
    %v722 = vadd.f32 %v721, %v659
    %v723 = vadd.f32 %v722, %v660
    %v724 = vadd.f32 %v723, %v661
    %v725 = vadd.f32 %v724, %v662
    %v726 = vadd.f32 %v725, %v663
    %v727 = vadd.f32 %v726, %v664
    %v728 = vadd.f32 %v727, %v665
    %v729 = vadd.f32 %v728, %v666
    %v730 = vadd.f32 %v729, %v667
    %v731 = vadd.f32 %v730, %v668
    %v732 = vadd.f32 %v731, %v669
    %v733 = vadd.f32 %v732, %v670
    %v734 = vadd.f32 %v733, %v671
    %v735 = vadd.f32 %v734, %v672
    %v736 = vadd.f32 %v735, %v673
    %v737 = vadd.f32 %v736, %v674
    %v738 = vadd.f32 %v737, %v675
    %v739 = vadd.f32 %v738, %v676
    %v740 = vadd.f32 %v739, %v677
    %v741 = vadd.f32 %v740, %v678
    %v742 = vadd.f32 %v741, %v679
    %v743 = vadd.f32 %v742, %v680
    %v744 = vadd.f32 %v743, %v681
    %v745 = vadd.f32 %v744, %v682
    %v746 = vadd.f32 %v745, %v683
    %v747 = vadd.f32 %v746, %v684
    %v748 = vadd.f32 %v747, %v685
    %v749 = vadd.f32 %v748, %v686
    %v750 = vadd.f32 %v749, %v687
    %v751 = vadd.f32 %v750, %v688
    %v752 = vadd.f32 %v751, %v689
    %v753 = vadd.f32 %v752, %v690
    %v754 = vadd.f32 %v753, %v691
    %v755 = vadd.f32 %v754, %v692
    %v756 = vadd.f32 %v755, %v693
    %v757 = vadd.f32 %v756, %v694
    %v758 = vadd.f32 %v757, %v695
    %v759 = vadd.f32 %v758, %v696
    %v760 = vadd.f32 %v759, %v697
    %v761 = vadd.f32 %v760, %v698
    %v762 = vadd.f32 %v761, %v699
    %v763 = vadd.f32 %v762, %v700
    %v764 = vadd.f32 %v763, %v701
    %v765 = vadd.f32 %v764, %v702
    %v766 = vrot.slane %v765, 4
    %v767 = vadd.f32 %v765, %v766
    %v768 = vrot.slane %v767, 2
    %v769 = vadd.f32 %v767, %v768
    %v770 = vrot.slane %v769, 1
    %v771 = vadd.f32 %v769, %v770
    %v772 = vmul.f32 %v639, %v639
    %v773 = vmul.f32 %v640, %v640
    %v774 = vmul.f32 %v641, %v641
    %v775 = vmul.f32 %v642, %v642
    %v776 = vmul.f32 %v643, %v643
    %v777 = vmul.f32 %v644, %v644
    %v778 = vmul.f32 %v645, %v645
    %v779 = vmul.f32 %v646, %v646
    %v780 = vmul.f32 %v647, %v647
    %v781 = vmul.f32 %v648, %v648
    %v782 = vmul.f32 %v649, %v649
    %v783 = vmul.f32 %v650, %v650
    %v784 = vmul.f32 %v651, %v651
    %v785 = vmul.f32 %v652, %v652
    %v786 = vmul.f32 %v653, %v653
    %v787 = vmul.f32 %v654, %v654
    %v788 = vmul.f32 %v655, %v655
    %v789 = vmul.f32 %v656, %v656
    %v790 = vmul.f32 %v657, %v657
    %v791 = vmul.f32 %v658, %v658
    %v792 = vmul.f32 %v659, %v659
    %v793 = vmul.f32 %v660, %v660
    %v794 = vmul.f32 %v661, %v661
    %v795 = vmul.f32 %v662, %v662
    %v796 = vmul.f32 %v663, %v663
    %v797 = vmul.f32 %v664, %v664
    %v798 = vmul.f32 %v665, %v665
    %v799 = vmul.f32 %v666, %v666
    %v800 = vmul.f32 %v667, %v667
    %v801 = vmul.f32 %v668, %v668
    %v802 = vmul.f32 %v669, %v669
    %v803 = vmul.f32 %v670, %v670
    %v804 = vmul.f32 %v671, %v671
    %v805 = vmul.f32 %v672, %v672
    %v806 = vmul.f32 %v673, %v673
    %v807 = vmul.f32 %v674, %v674
    %v808 = vmul.f32 %v675, %v675
    %v809 = vmul.f32 %v676, %v676
    %v810 = vmul.f32 %v677, %v677
    %v811 = vmul.f32 %v678, %v678
    %v812 = vmul.f32 %v679, %v679
    %v813 = vmul.f32 %v680, %v680
    %v814 = vmul.f32 %v681, %v681
    %v815 = vmul.f32 %v682, %v682
    %v816 = vmul.f32 %v683, %v683
    %v817 = vmul.f32 %v684, %v684
    %v818 = vmul.f32 %v685, %v685
    %v819 = vmul.f32 %v686, %v686
    %v820 = vmul.f32 %v687, %v687
    %v821 = vmul.f32 %v688, %v688
    %v822 = vmul.f32 %v689, %v689
    %v823 = vmul.f32 %v690, %v690
    %v824 = vmul.f32 %v691, %v691
    %v825 = vmul.f32 %v692, %v692
    %v826 = vmul.f32 %v693, %v693
    %v827 = vmul.f32 %v694, %v694
    %v828 = vmul.f32 %v695, %v695
    %v829 = vmul.f32 %v696, %v696
    %v830 = vmul.f32 %v697, %v697
    %v831 = vmul.f32 %v698, %v698
    %v832 = vmul.f32 %v699, %v699
    %v833 = vmul.f32 %v700, %v700
    %v834 = vmul.f32 %v701, %v701
    %v835 = vmul.f32 %v702, %v702
    %v836 = vadd.f32 %v772, %v773
    %v837 = vadd.f32 %v836, %v774
    %v838 = vadd.f32 %v837, %v775
    %v839 = vadd.f32 %v838, %v776
    %v840 = vadd.f32 %v839, %v777
    %v841 = vadd.f32 %v840, %v778
    %v842 = vadd.f32 %v841, %v779
    %v843 = vadd.f32 %v842, %v780
    %v844 = vadd.f32 %v843, %v781
    %v845 = vadd.f32 %v844, %v782
    %v846 = vadd.f32 %v845, %v783
    %v847 = vadd.f32 %v846, %v784
    %v848 = vadd.f32 %v847, %v785
    %v849 = vadd.f32 %v848, %v786
    %v850 = vadd.f32 %v849, %v787
    %v851 = vadd.f32 %v850, %v788
    %v852 = vadd.f32 %v851, %v789
    %v853 = vadd.f32 %v852, %v790
    %v854 = vadd.f32 %v853, %v791
    %v855 = vadd.f32 %v854, %v792
    %v856 = vadd.f32 %v855, %v793
    %v857 = vadd.f32 %v856, %v794
    %v858 = vadd.f32 %v857, %v795
    %v859 = vadd.f32 %v858, %v796
    %v860 = vadd.f32 %v859, %v797
    %v861 = vadd.f32 %v860, %v798
    %v862 = vadd.f32 %v861, %v799
    %v863 = vadd.f32 %v862, %v800
    %v864 = vadd.f32 %v863, %v801
    %v865 = vadd.f32 %v864, %v802
    %v866 = vadd.f32 %v865, %v803
    %v867 = vadd.f32 %v866, %v804
    %v868 = vadd.f32 %v867, %v805
    %v869 = vadd.f32 %v868, %v806
    %v870 = vadd.f32 %v869, %v807
    %v871 = vadd.f32 %v870, %v808
    %v872 = vadd.f32 %v871, %v809
    %v873 = vadd.f32 %v872, %v810
    %v874 = vadd.f32 %v873, %v811
    %v875 = vadd.f32 %v874, %v812
    %v876 = vadd.f32 %v875, %v813
    %v877 = vadd.f32 %v876, %v814
    %v878 = vadd.f32 %v877, %v815
    %v879 = vadd.f32 %v878, %v816
    %v880 = vadd.f32 %v879, %v817
    %v881 = vadd.f32 %v880, %v818
    %v882 = vadd.f32 %v881, %v819
    %v883 = vadd.f32 %v882, %v820
    %v884 = vadd.f32 %v883, %v821
    %v885 = vadd.f32 %v884, %v822
    %v886 = vadd.f32 %v885, %v823
    %v887 = vadd.f32 %v886, %v824
    %v888 = vadd.f32 %v887, %v825
    %v889 = vadd.f32 %v888, %v826
    %v890 = vadd.f32 %v889, %v827
    %v891 = vadd.f32 %v890, %v828
    %v892 = vadd.f32 %v891, %v829
    %v893 = vadd.f32 %v892, %v830
    %v894 = vadd.f32 %v893, %v831
    %v895 = vadd.f32 %v894, %v832
    %v896 = vadd.f32 %v895, %v833
    %v897 = vadd.f32 %v896, %v834
    %v898 = vadd.f32 %v897, %v835
    %v899 = vrot.slane %v898, 4
    %v900 = vadd.f32 %v898, %v899
    %v901 = vrot.slane %v900, 2
    %v902 = vadd.f32 %v900, %v901
    %v903 = vrot.slane %v902, 1
    %v904 = vadd.f32 %v902, %v903
    %vm905 = vcmask 1040384
    %v906 = vsel %vm905, %v771, %v904
    %907 = vst [vmem:[#allocation2] sm:$0x3] %v906
    // Predicated region
    $region10: #{tpu_custom_call.1} parent=1 // pred_check
      _
    $region11: #{tpu_custom_call.1} parent=1 // pred_check_branch
      %909 = sbr.rel (0) target = $region13
    $region12: #{tpu_custom_call.1} parent=1 // pred_region
      %s911 = ssub.s32 32, 32
      %912 = vsyncadd [#allocation3], %s911
      %s914 = sshll.u32 [#allocation2], 4
      %s915 = int_to_ptr.vmem [resolvable:$true] %s914
      %917 = dma.vmem_to_hbm [thread:$0]  %s915, 32, %s2, [#allocation3]
    $region13: #{tpu_custom_call.1} parent=1 // pred_fallthru
      _
    // Predicated region
    $region14: #{tpu_custom_call.1} parent=1 // pred_check
      _
    $region15: #{tpu_custom_call.1} parent=1 // pred_check_branch
      %919 = sbr.rel (0) target = $region17
    $region16: #{tpu_custom_call.1} parent=1 // pred_region
      %920 = dma.done [#allocation3], 32
    $region17: #{tpu_custom_call.1} parent=1 // pred_fallthru
      _
    %921 = vsyncpa [#allocation3], 1

</llo_original>
